<compile_context>
chip_gen: v7x
topology: tpu7x:2x2x1
jax: 0.10.0
libtpu: 0.0.40
codegen_flags: <defaults>
</compile_context>

<pallas_src>
import jax
import jax.numpy as jnp
from jax import lax
from jax.experimental import pallas as pl
from jax.experimental.pallas import tpu as pltpu

LANE = 128      # vreg lane width
SUBLANE = 8     # vreg sublane count (f32)


def _round_up(n, m):
    return ((n + m - 1) // m) * m


def ppo_agent_kernel(x_ref, w1_ref, b1_ref, w2_ref, b2_ref, wht_ref, bht_ref,
                     out_ref):
    """One batch tile per grid step; weights are VMEM-resident.

    Matmuls accumulate in f32 (preferred_element_type); bias-add / ReLU in f32;
    operands are cast back to the packed dtype (bf16 by default) between layers.
    The fused head is computed directly in transposed form [HEAD_PAD, TB] so the
    output store is narrow on sublanes and dense on lanes.
    """
    cdt = w1_ref.dtype
    x = x_ref[...]

    h1 = jnp.dot(x, w1_ref[...], preferred_element_type=jnp.float32) + b1_ref[...]
    h1 = jnp.maximum(h1, 0.0).astype(cdt)

    h2 = jnp.dot(h1, w2_ref[...], preferred_element_type=jnp.float32) + b2_ref[...]
    h2 = jnp.maximum(h2, 0.0).astype(cdt)

    # out_t[o, b] = sum_h wht[o, h] * h2[b, h]   (i.e. (h2 @ wh).T, no explicit
    # transpose: dot_general contracts the hidden axis of both operands).
    out_t = lax.dot_general(
        wht_ref[...], h2,
        dimension_numbers=(((1,), (1,)), ((), ())),
        preferred_element_type=jnp.float32) + bht_ref[...]
    out_ref[...] = out_t.astype(out_ref.dtype)


def pack_params(params, param_dtype=jnp.bfloat16):
    """One-time packing: fuse policy+value heads, transpose the head, zero-pad.

    Weights are cast to `param_dtype` (bf16 by default: ~3x fewer MXU passes and
    half the HBM bytes vs f32); biases stay f32 so bias-add/ReLU stay f32.
    Zero padding keeps results exact: padded hidden lanes are ReLU(0) = 0.
    """
    w1, b1, w2, b2, wp, bp, wv, bv = params
    in_size, hidden = w1.shape
    out_size = wp.shape[1]
    HP = _round_up(hidden, LANE)                   # hidden padded to lane width
    HEAD = _round_up(out_size + 1, SUBLANE)        # policy|value padded to sublanes

    def pad2(a, rows, cols):
        return jnp.pad(a, ((0, rows - a.shape[0]), (0, cols - a.shape[1])))

    w1p = pad2(w1, in_size, HP).astype(param_dtype)                       # [IN, HP]
    b1p = pad2(b1, 1, HP).astype(jnp.float32)                             # [1,  HP]
    w2p = pad2(w2, HP, HP).astype(param_dtype)                            # [HP, HP]
    b2p = pad2(b2, 1, HP).astype(jnp.float32)                             # [1,  HP]
    wht = pad2(jnp.concatenate([wp, wv], axis=1).T, HEAD, HP).astype(param_dtype)
    bht = pad2(jnp.concatenate([bp, bv], axis=1).T, HEAD, 1).astype(jnp.float32)
    return (w1p, b1p, w2p, b2p, wht, bht)


def ppo_agent_forward_pallas(x, packed, output_size, *, block_batch=2048):
    """Batch-gridded Pallas call; returns (policy_logits [B,O], value [B,1])."""
    w1p, b1p, w2p, b2p, whtp, bhtp = packed
    B, IN = x.shape
    HEAD = whtp.shape[0]
    cdt = w1p.dtype

    if B >= 2 * LANE:
        # Large batch: tile rows with a 128-multiple tile, no wrapper pad (Pallas
        # masks the ragged last block), and guarantee >= 2 grid steps so v7x's
        # two TensorCores both get work on the "parallel" axis.
        TB = max(LANE, min(_round_up(block_batch, LANE),
                           _round_up(pl.cdiv(B, 2), LANE)))
        Bp = B
        xin = x.astype(cdt)
    else:
        # Small batch: single tile rounded up to the sublane width.
        TB = _round_up(max(B, SUBLANE), SUBLANE)
        Bp = TB
        xin = x.astype(cdt)
        if Bp != B:
            xin = jnp.pad(xin, ((0, Bp - B), (0, 0)))

    grid = (pl.cdiv(Bp, TB),)

    # Constant index_map => weights/biases stay VMEM-resident across grid steps.
    resident = lambda a: pl.BlockSpec(a.shape, lambda i: (0, 0))

    fused_t = pl.pallas_call(
        ppo_agent_kernel,
        out_shape=jax.ShapeDtypeStruct((HEAD, Bp), jnp.float32),
        grid=grid,
        in_specs=[
            pl.BlockSpec((TB, IN), lambda i: (i, 0)),   # x: streamed per batch tile
            resident(w1p), resident(b1p),
            resident(w2p), resident(b2p),
            resident(whtp), resident(bhtp),
        ],
        # Transposed output: HEAD (8) sublanes x TB lanes -> lane-dense stores and
        # ~16x less writeback than a [TB, 128] slab.
        out_specs=pl.BlockSpec((HEAD, TB), lambda i: (0, i)),
        compiler_params=pltpu.CompilerParams(
            dimension_semantics=("parallel",)),
    )(xin, w1p, b1p, w2p, b2p, whtp, bhtp)

    # Tiny ([HEAD, B]) slices/transposes; fuse into consumers when called under jit.
    policy_logits = fused_t[:output_size, :B].T
    value = fused_t[output_size:output_size + 1, :B].T
    return policy_logits, value


def xla_forward(x, packed, output_size):
    """Plain-XLA path for tiny (action-selection sized) batches."""
    w1p, b1p, w2p, b2p, whtp, bhtp = packed
    cdt = w1p.dtype
    xc = x.astype(cdt)
    h1 = jnp.maximum(jnp.dot(xc, w1p, preferred_element_type=jnp.float32) + b1p, 0.0)
    h2 = jnp.maximum(
        jnp.dot(h1.astype(cdt), w2p, preferred_element_type=jnp.float32) + b2p, 0.0)
    out_t = lax.dot_general(whtp, h2.astype(cdt),
                            dimension_numbers=(((1,), (1,)), ((), ())),
                            preferred_element_type=jnp.float32) + bhtp
    return out_t[:output_size, :].T, out_t[output_size:output_size + 1, :].T


def ppo_agent_forward(x, packed, output_size, *, block_batch=2048,
                      small_batch_threshold=256):
    """Dispatcher: pallas_call launch overhead dominates tiny batches -> use XLA."""
    if x.shape[0] < small_batch_threshold:
        return xla_forward(x, packed, output_size)
    return ppo_agent_forward_pallas(x, packed, output_size, block_batch=block_batch)


def init_params(key, input_size, hidden_size, output_size):
    """nn.Linear-style U(-1/sqrt(fan_in), +1/sqrt(fan_in)) init (weights transposed)."""
    def linear(key, fan_in, fan_out):
        kw, kb = jax.random.split(key)
        bound = 1.0 / jnp.sqrt(float(fan_in))
        w = jax.random.uniform(kw, (fan_in, fan_out), jnp.float32, -bound, bound)
        b = jax.random.uniform(kb, (1, fan_out), jnp.float32, -bound, bound)
        return w, b

    k1, k2, k3, k4 = jax.random.split(key, 4)
    w1, b1 = linear(k1, input_size, hidden_size)
    w2, b2 = linear(k2, hidden_size, hidden_size)
    wp, bp = linear(k3, hidden_size, output_size)
    wv, bv = linear(k4, hidden_size, 1)
    return (w1, b1, w2, b2, wp, bp, wv, bv)


def reference_forward(x, params):
    """Pure-JAX reference (mirrors the PyTorch forward), full f32 matmul precision."""
    w1, b1, w2, b2, wp, bp, wv, bv = params
    dot = lambda a, b: jnp.dot(a, b, precision=lax.Precision.HIGHEST)
    h1 = jnp.maximum(dot(x, w1) + b1, 0.0)
    h2 = jnp.maximum(dot(h1, w2) + b2, 0.0)
    return dot(h2, wp) + bp, dot(h2, wv) + bv


if __name__ == "__main__":
    # Small shapes consistent with the module's forward.
    batch, input_size, hidden_size, output_size = 8, 16, 32, 4

    key = jax.random.PRNGKey(0)
    kx, kp, kx2 = jax.random.split(key, 3)
    x = jax.random.normal(kx, (batch, input_size), dtype=jnp.float32)
    params = init_params(kp, input_size, hidden_size, output_size)
    ref_policy, ref_value = reference_forward(x, params)

    # (1) Pallas kernel with f32 params.  Tolerance is 2e-2 (not 1e-5) because the
    #     MXU / XLA default matmul precision may round operands to bf16 on TPU.
    packed_f32 = pack_params(params, param_dtype=jnp.float32)
    p_f32, v_f32 = ppo_agent_forward_pallas(x, packed_f32, output_size)
    jax.block_until_ready((p_f32, v_f32))
    assert p_f32.shape == (batch, output_size) and v_f32.shape == (batch, 1)
    assert jnp.allclose(p_f32, ref_policy, atol=2e-2, rtol=2e-2)
    assert jnp.allclose(v_f32, ref_value, atol=2e-2, rtol=2e-2)

    # (2) Pallas kernel with bf16 params (default packing; f32 accumulation).
    packed_bf16 = pack_params(params)
    p_bf, v_bf = ppo_agent_forward_pallas(x, packed_bf16, output_size)
    jax.block_until_ready((p_bf, v_bf))
    assert jnp.allclose(p_bf, ref_policy, atol=5e-2, rtol=5e-2)
    assert jnp.allclose(v_bf, ref_value, atol=5e-2, rtol=5e-2)

    # (3) Multi-step batch grid with a ragged last block (B=384 -> TB=256, 2
    #     "parallel" grid steps for v7x's two TensorCores), run under jit so the
    #     tiny policy/value slices fuse into consumers.
    x2 = jax.random.normal(kx2, (384, input_size), dtype=jnp.float32)
    fwd = jax.jit(lambda xx: ppo_agent_forward(xx, packed_bf16, output_size))
    p2, v2 = fwd(x2)
    jax.block_until_ready((p2, v2))
    rp2, rv2 = reference_forward(x2, params)
    assert p2.shape == (384, output_size) and v2.shape == (384, 1)
    assert jnp.allclose(p2, rp2, atol=5e-2, rtol=5e-2)
    assert jnp.allclose(v2, rv2, atol=5e-2, rtol=5e-2)

    # (4) Small-batch dispatcher falls back to plain XLA (launch-overhead win).
    p3, v3 = ppo_agent_forward(x, packed_bf16, output_size)
    jax.block_until_ready((p3, v3))
    assert jnp.allclose(p3, ref_policy, atol=5e-2, rtol=5e-2)

    print("KERNEL_OK")
</pallas_src>

<mosaic_0001>
module attributes {stable_mosaic.version = 11 : i64} {
  func.func @ppo_agent_kernel(%arg0: i32, %arg1: memref<8x16xf32, #tpu.memory_space<vmem>>, %arg2: memref<16x128xf32, #tpu.memory_space<vmem>>, %arg3: memref<1x128xf32, #tpu.memory_space<vmem>>, %arg4: memref<128x128xf32, #tpu.memory_space<vmem>>, %arg5: memref<1x128xf32, #tpu.memory_space<vmem>>, %arg6: memref<8x128xf32, #tpu.memory_space<vmem>>, %arg7: memref<8x1xf32, #tpu.memory_space<vmem>>, %arg8: memref<8x8xf32, #tpu.memory_space<vmem>>) attributes {dimension_semantics = [#tpu.dimension_semantics<parallel>], iteration_bounds = array<i64: 1>, scalar_prefetch = 0 : i64, scratch_operands = 0 : i64, tpu.core_type = #tpu.core_type<tc>, window_params = [{transform_indices = @transform_0, window_bounds = array<i64: 8, 16>}, {pipeline_mode = #tpu.pipeline_mode<synchronous>, transform_indices = @transform_1, window_bounds = array<i64: 16, 128>}, {pipeline_mode = #tpu.pipeline_mode<synchronous>, transform_indices = @transform_2, window_bounds = array<i64: 1, 128>}, {pipeline_mode = #tpu.pipeline_mode<synchronous>, transform_indices = @transform_3, window_bounds = array<i64: 128, 128>}, {pipeline_mode = #tpu.pipeline_mode<synchronous>, transform_indices = @transform_4, window_bounds = array<i64: 1, 128>}, {pipeline_mode = #tpu.pipeline_mode<synchronous>, transform_indices = @transform_5, window_bounds = array<i64: 8, 128>}, {pipeline_mode = #tpu.pipeline_mode<synchronous>, transform_indices = @transform_6, window_bounds = array<i64: 8, 1>}, {transform_indices = @transform_7, window_bounds = array<i64: 8, 8>}]} {
    %c0 = arith.constant 0 : index
    %c0_0 = arith.constant 0 : index
    %0 = vector.load %arg1[%c0, %c0_0] : memref<8x16xf32, #tpu.memory_space<vmem>>, vector<8x16xf32>
    %c0_1 = arith.constant 0 : index
    %c0_2 = arith.constant 0 : index
    %1 = vector.load %arg2[%c0_1, %c0_2] : memref<16x128xf32, #tpu.memory_space<vmem>>, vector<16x128xf32>
    %cst = arith.constant dense<0.000000e+00> : vector<8x128xf32>
    %2 = tpu.matmul %0, %1, %cst {dimension_numbers = #tpu.dot_dimension_numbers<[1], [0], [0], [1], [0, 0, 1, 1], [], []>} : vector<8x16xf32>, vector<16x128xf32>, vector<8x128xf32> -> vector<8x128xf32>
    %c0_3 = arith.constant 0 : index
    %c0_4 = arith.constant 0 : index
    %3 = vector.load %arg3[%c0_3, %c0_4] : memref<1x128xf32, #tpu.memory_space<vmem>>, vector<1x128xf32>
    %4 = vector.broadcast %3 : vector<1x128xf32> to vector<8x128xf32>
    %5 = arith.addf %2, %4 : vector<8x128xf32>
    %cst_5 = arith.constant 0.000000e+00 : f32
    %6 = vector.broadcast %cst_5 : f32 to vector<8x128xf32>
    %7 = arith.maximumf %5, %6 : vector<8x128xf32>
    %c0_6 = arith.constant 0 : index
    %c0_7 = arith.constant 0 : index
    %8 = vector.load %arg4[%c0_6, %c0_7] : memref<128x128xf32, #tpu.memory_space<vmem>>, vector<128x128xf32>
    %cst_8 = arith.constant dense<0.000000e+00> : vector<8x128xf32>
    %9 = tpu.matmul %7, %8, %cst_8 {dimension_numbers = #tpu.dot_dimension_numbers<[1], [0], [0], [1], [0, 0, 1, 1], [], []>} : vector<8x128xf32>, vector<128x128xf32>, vector<8x128xf32> -> vector<8x128xf32>
    %c0_9 = arith.constant 0 : index
    %c0_10 = arith.constant 0 : index
    %10 = vector.load %arg5[%c0_9, %c0_10] : memref<1x128xf32, #tpu.memory_space<vmem>>, vector<1x128xf32>
    %11 = vector.broadcast %10 : vector<1x128xf32> to vector<8x128xf32>
    %12 = arith.addf %9, %11 : vector<8x128xf32>
    %cst_11 = arith.constant 0.000000e+00 : f32
    %13 = vector.broadcast %cst_11 : f32 to vector<8x128xf32>
    %14 = arith.maximumf %12, %13 : vector<8x128xf32>
    %c0_12 = arith.constant 0 : index
    %c0_13 = arith.constant 0 : index
    %15 = vector.load %arg6[%c0_12, %c0_13] : memref<8x128xf32, #tpu.memory_space<vmem>>, vector<8x128xf32>
    %cst_14 = arith.constant dense<0.000000e+00> : vector<8x8xf32>
    %16 = tpu.matmul %15, %14, %cst_14 {dimension_numbers = #tpu.dot_dimension_numbers<[1], [1], [0], [0], [0, 0, 1, 0], [], []>} : vector<8x128xf32>, vector<8x128xf32>, vector<8x8xf32> -> vector<8x8xf32>
    %c0_15 = arith.constant 0 : index
    %c0_16 = arith.constant 0 : index
    %17 = vector.load %arg7[%c0_15, %c0_16] : memref<8x1xf32, #tpu.memory_space<vmem>>, vector<8x1xf32>
    %18 = vector.broadcast %17 : vector<8x1xf32> to vector<8x8xf32>
    %19 = arith.addf %16, %18 : vector<8x8xf32>
    %c0_17 = arith.constant 0 : index
    %c0_18 = arith.constant 0 : index
    %20 = vector.load %arg8[%c0_17, %c0_18] : memref<8x8xf32, #tpu.memory_space<vmem>>, vector<8x8xf32>
    tpu.vector_store %arg8[%c0_17, %c0_18], %19 {strides = array<i32>} : memref<8x8xf32, #tpu.memory_space<vmem>>, vector<8x8xf32>,
    return
  }
  func.func @transform_0(%arg0: i32) -> (i32, i32) {
    %c0_i32 = arith.constant 0 : i32
    %c0_i32_0 = arith.constant 0 : i32
    return %arg0, %c0_i32 : i32, i32
  }
  func.func @transform_1(%arg0: i32) -> (i32, i32) {
    %c0_i32 = arith.constant 0 : i32
    %c0_i32_0 = arith.constant 0 : i32
    %c0_i32_1 = arith.constant 0 : i32
    return %c0_i32, %c0_i32_0 : i32, i32
  }
  func.func @transform_2(%arg0: i32) -> (i32, i32) {
    %c0_i32 = arith.constant 0 : i32
    %c0_i32_0 = arith.constant 0 : i32
    %c0_i32_1 = arith.constant 0 : i32
    return %c0_i32, %c0_i32_0 : i32, i32
  }
  func.func @transform_3(%arg0: i32) -> (i32, i32) {
    %c0_i32 = arith.constant 0 : i32
    %c0_i32_0 = arith.constant 0 : i32
    %c0_i32_1 = arith.constant 0 : i32
    return %c0_i32, %c0_i32_0 : i32, i32
  }
  func.func @transform_4(%arg0: i32) -> (i32, i32) {
    %c0_i32 = arith.constant 0 : i32
    %c0_i32_0 = arith.constant 0 : i32
    %c0_i32_1 = arith.constant 0 : i32
    return %c0_i32, %c0_i32_0 : i32, i32
  }
  func.func @transform_5(%arg0: i32) -> (i32, i32) {
    %c0_i32 = arith.constant 0 : i32
    %c0_i32_0 = arith.constant 0 : i32
    %c0_i32_1 = arith.constant 0 : i32
    return %c0_i32, %c0_i32_0 : i32, i32
  }
  func.func @transform_6(%arg0: i32) -> (i32, i32) {
    %c0_i32 = arith.constant 0 : i32
    %c0_i32_0 = arith.constant 0 : i32
    %c0_i32_1 = arith.constant 0 : i32
    return %c0_i32, %c0_i32_0 : i32, i32
  }
  func.func @transform_7(%arg0: i32) -> (i32, i32) {
    %c0_i32 = arith.constant 0 : i32
    %c0_i32_0 = arith.constant 0 : i32
    return %c0_i32, %arg0 : i32, i32
  }
}

</mosaic_0001>

<llo_original>
// kernel: tpu_custom_call.1
$region0: #{tpu_custom_call.1}
  #allocation0 [shape = 'u32[]', space=smem, size = 0x4, offset = 0x4, fixed_abs, tag = 'smem constant byte address 0x4 - core index']
  #allocation1 [shape = 'u32[144,128]{1,0:T(1,128)}', space=vmem, size = 0x12000, scoped, tag = 'internal scratch']
  %s0 = inlined_call_operand.vmem [shape: f32[8,16], index: 0, kind: input, shape index: {}]
  %s1 = inlined_call_operand.hbm [shape: f32[16,128], index: 1, kind: input, shape index: {}]
  %s2 = inlined_call_operand.hbm [shape: f32[1,128], index: 2, kind: input, shape index: {}]
  %s3 = inlined_call_operand.hbm [shape: f32[128,128], index: 3, kind: input, shape index: {}]
  %s4 = inlined_call_operand.vmem [shape: f32[1,128], index: 4, kind: input, shape index: {}]
  %s5 = inlined_call_operand.vmem [shape: f32[8,128], index: 5, kind: input, shape index: {}]
  %s6 = inlined_call_operand.vmem [shape: f32[8,1], index: 6, kind: input, shape index: {}]
  %s7 = inlined_call_operand.hbm [shape: f32[8,8], index: 7, kind: output, shape index: {}]
  %s8 = sld [smem:[#allocation0]]
  $region50: #{tpu_custom_call.1} parent=0
    _
  %s10 = ssub.s32 1, %s8
  %s11 = scalar_select 0, %s10, %s8
  $region1: #{tpu_custom_call.1} parent=0
    #allocation2 [shape = 'u8[8192]{0}', space=vmem, size = 0x2000, scoped, tag = 'input window, operand 1, single buffered']
    #allocation3 [shape = 's32[1]{0}', space=sflag, size = 0x4, scoped, tag = 'scoped memory for tpu_custom_call.1']
    #allocation4 [shape = 's32[1]{0}', space=sflag, size = 0x4, scoped, tag = 'scoped memory for tpu_custom_call.1']
    #allocation5 [shape = 'u8[512]{0}', space=vmem, size = 0x400, scoped, tag = 'input window, operand 2, single buffered']
    #allocation6 [shape = 's32[1]{0}', space=sflag, size = 0x4, scoped, tag = 'scoped memory for tpu_custom_call.1']
    #allocation7 [shape = 'u8[65536]{0}', space=vmem, size = 0x10000, scoped, tag = 'input window, operand 3, single buffered']
    #allocation8 [shape = 'u8[4096]{0}', space=vmem, size = 0x1000, scoped, tag = 'output window, operand 0, single buffered']
    %12 = vsyncpa [#allocation3], 0
    %13 = vsyncpa [#allocation6], 0
    %14 = vsyncpa [#allocation4], 0
    // Predicated region
    $region2: #{tpu_custom_call.1} parent=1 // pred_check
      _
    $region3: #{tpu_custom_call.1} parent=1 // pred_check_branch
      %16 = sbr.rel (0) target = $region5
    $region4: #{tpu_custom_call.1} parent=1 // pred_region
      _
    $region5: #{tpu_custom_call.1} parent=1 // pred_fallthru
      _
    // Predicated region
    $region6: #{tpu_custom_call.1} parent=1 // pred_check
      _
    $region7: #{tpu_custom_call.1} parent=1 // pred_check_branch
      %18 = sbr.rel (0) target = $region9
    $region8: #{tpu_custom_call.1} parent=1 // pred_region
      %s20 = ssub.s32 256, 256
      %21 = vsyncadd [#allocation3], %s20
      %s22 = sshll.u32 [#allocation2], 4
      %s23 = int_to_ptr.vmem [resolvable:$true] %s22
      %28 = dma.hbm_to_vmem [thread:$0]  %s1, 256, %s23, [#allocation3], 128, 128, 8
    $region9: #{tpu_custom_call.1} parent=1 // pred_fallthru
      _
    // Predicated region
    $region10: #{tpu_custom_call.1} parent=1 // pred_check
      _
    $region11: #{tpu_custom_call.1} parent=1 // pred_check_branch
      %30 = sbr.rel (0) target = $region13
    $region12: #{tpu_custom_call.1} parent=1 // pred_region
      %s32 = ssub.s32 16, 16
      %33 = vsyncadd [#allocation6], %s32
      %s35 = sshll.u32 [#allocation5], 4
      %s36 = int_to_ptr.vmem [resolvable:$true] %s35
      %38 = dma.hbm_to_vmem [thread:$0]  %s2, 16, %s36, [#allocation6]
    $region13: #{tpu_custom_call.1} parent=1 // pred_fallthru
      _
    // Predicated region
    $region14: #{tpu_custom_call.1} parent=1 // pred_check
      _
    $region15: #{tpu_custom_call.1} parent=1 // pred_check_branch
      %40 = sbr.rel (0) target = $region17
    $region16: #{tpu_custom_call.1} parent=1 // pred_region
      %s42 = ssub.s32 2048, 2048
      %43 = vsyncadd [#allocation6], %s42
      %s44 = sshll.u32 [#allocation7], 4
      %s45 = int_to_ptr.vmem [resolvable:$true] %s44
      %50 = dma.hbm_to_vmem [thread:$0]  %s3, 2048, %s45, [#allocation6], 128, 128, 8
    $region17: #{tpu_custom_call.1} parent=1 // pred_fallthru
      _
    // Predicated region
    $region18: #{tpu_custom_call.1} parent=1 // pred_check
      _
    $region19: #{tpu_custom_call.1} parent=1 // pred_check_branch
      %52 = sbr.rel (0) target = $region21
    $region20: #{tpu_custom_call.1} parent=1 // pred_region
      _
    $region21: #{tpu_custom_call.1} parent=1 // pred_fallthru
      _
    // Predicated region
    $region22: #{tpu_custom_call.1} parent=1 // pred_check
      _
    $region23: #{tpu_custom_call.1} parent=1 // pred_check_branch
      %54 = sbr.rel (0) target = $region25
    $region24: #{tpu_custom_call.1} parent=1 // pred_region
      _
    $region25: #{tpu_custom_call.1} parent=1 // pred_fallthru
      _
    // Predicated region
    $region26: #{tpu_custom_call.1} parent=1 // pred_check
      _
    $region27: #{tpu_custom_call.1} parent=1 // pred_check_branch
      %56 = sbr.rel (0) target = $region29
    $region28: #{tpu_custom_call.1} parent=1 // pred_region
      _
    $region29: #{tpu_custom_call.1} parent=1 // pred_fallthru
      _
    // Predicated region
    $region30: #{tpu_custom_call.1} parent=1 // pred_check
      _
    $region31: #{tpu_custom_call.1} parent=1 // pred_check_branch
      %58 = sbr.rel (0) target = $region33
    $region32: #{tpu_custom_call.1} parent=1 // pred_region
      %59 = dma.done [#allocation3], 256
    $region33: #{tpu_custom_call.1} parent=1 // pred_fallthru
      _
    // Predicated region
    $region34: #{tpu_custom_call.1} parent=1 // pred_check
      _
    $region35: #{tpu_custom_call.1} parent=1 // pred_check_branch
      %61 = sbr.rel (0) target = $region37
    $region36: #{tpu_custom_call.1} parent=1 // pred_region
      %62 = dma.done [#allocation6], 16
    $region37: #{tpu_custom_call.1} parent=1 // pred_fallthru
      _
    // Predicated region
    $region38: #{tpu_custom_call.1} parent=1 // pred_check
      _
    $region39: #{tpu_custom_call.1} parent=1 // pred_check_branch
      %64 = sbr.rel (0) target = $region41
    $region40: #{tpu_custom_call.1} parent=1 // pred_region
      %65 = dma.done [#allocation6], 2048
    $region41: #{tpu_custom_call.1} parent=1 // pred_fallthru
      _
    %v66 = vld [vmem:[%s0] sm:$0xff]
    %v67 = vld [vmem:[#allocation2] sm:$0xff]
    %v68 = vld [vmem:[#allocation2 + $0x8] sm:$0xff]
    %v69 = vld [vmem:[#allocation5] sm:$0x1]
    %v71 = vlaneseq
    %v72 = vshrl.u32 %v71, 7
    %v73 = vsub.s32 0, %v72
    %v74 = vrot.slane %v69, %v73
    %vm76 = vcmask 130048
    %v78 = vsel %vm76, %v66, 0
    %80 = vmatprep.subr.mxu0 0.0
    %81 = vmatpush1.msra.mxu0 %v67
    %82 = vmatprep.subr.mxu0 0.0
    %83 = vmatpush1.msra.mxu0 %v68
    %84 = vmatprep.subr.mxu0 0.0
    %85 = vmatpush1.msra.mxu0 0.0
    %86 = vmatprep.subr.mxu0 0.0
    %87 = vmatpush1.msra.mxu0 0.0
    %88 = vmatprep.subr.mxu0 0.0
    %89 = vmatpush1.msra.mxu0 0.0
    %90 = vmatprep.subr.mxu0 0.0
    %91 = vmatpush1.msra.mxu0 0.0
    %92 = vmatprep.subr.mxu0 0.0
    %93 = vmatpush1.msra.mxu0 0.0
    %94 = vmatprep.subr.mxu0 0.0
    %95 = vmatpush1.msra.mxu0 0.0
    %96 = vmatprep.subr.mxu0 0.0
    %97 = vmatpush1.msra.mxu0 0.0
    %98 = vmatprep.subr.mxu0 0.0
    %99 = vmatpush1.msra.mxu0 0.0
    %100 = vmatprep.subr.mxu0 0.0
    %101 = vmatpush1.msra.mxu0 0.0
    %102 = vmatprep.subr.mxu0 0.0
    %103 = vmatpush1.msra.mxu0 0.0
    %104 = vmatprep.subr.mxu0 0.0
    %105 = vmatpush1.msra.mxu0 0.0
    %106 = vmatprep.subr.mxu0 0.0
    %107 = vmatpush1.msra.mxu0 0.0
    %108 = vmatprep.subr.mxu0 0.0
    %109 = vmatpush1.msra.mxu0 0.0
    %110 = vmatprep.subr.mxu0 0.0
    %111 = vmatpush1.msra.mxu0 0.0
    %112 = vmatprep.subr.mxu0 0.0
    %113 = vmatpush1.msra.mxu0 0.0
    %114 = vmatprep.subr.mxu0 0.0
    %115 = vmatpush1.msra.mxu0 0.0
    %116 = vmatprep.subr.mxu0 0.0
    %117 = vmatpush1.msra.mxu0 0.0
    %118 = vmatprep.subr.mxu0 0.0
    %119 = vmatpush1.msra.mxu0 0.0
    %120 = vmatprep.subr.mxu0 0.0
    %121 = vmatpush1.msra.mxu0 0.0
    %122 = vmatprep.subr.mxu0 0.0
    %123 = vmatpush1.msra.mxu0 0.0
    %124 = vmatprep.subr.mxu0 0.0
    %125 = vmatpush1.msra.mxu0 0.0
    %126 = vmatprep.subr.mxu0 0.0
    %127 = vmatpush1.msra.mxu0 0.0
    %128 = vmatprep.subr.mxu0 0.0
    %129 = vmatpush1.msra.mxu0 0.0
    %130 = vmatprep.subr.mxu0 0.0
    %131 = vmatpush1.msra.mxu0 0.0
    %132 = vmatprep.subr.mxu0 0.0
    %133 = vmatpush1.msra.mxu0 0.0
    %134 = vmatprep.subr.mxu0 0.0
    %135 = vmatpush1.msra.mxu0 0.0
    %136 = vmatprep.subr.mxu0 0.0
    %137 = vmatpush1.msra.mxu0 0.0
    %138 = vmatprep.subr.mxu0 0.0
    %139 = vmatpush1.msra.mxu0 0.0
    %140 = vmatprep.subr.mxu0 0.0
    %141 = vmatpush1.msra.mxu0 0.0
    %142 = vmatprep.subr.mxu0 0.0
    %143 = vmatpush1.msra.mxu0 0.0
    %144 = vmatprep.mubr.f32.mxu0 0.0
    %145 = vmatmul.mubr.f32.gmra.mrb[0].mxu0 %v78
    %v146 = vpop.f32.mrb[0].mxu0
    %v147 = vadd.f32 %v74, %v146
    %v148 = vpop.f32.mrb[0].mxu0
    %149 = vdwg.mxu0
    %v150 = vmax.f32 %v147, 0.0
    %v151 = vld [vmem:[#allocation7] sm:$0xff]
    %v152 = vld [vmem:[#allocation7 + $0x8] sm:$0xff]
    %v153 = vld [vmem:[#allocation7 + $0x10] sm:$0xff]
    %v154 = vld [vmem:[#allocation7 + $0x18] sm:$0xff]
    %v155 = vld [vmem:[#allocation7 + $0x20] sm:$0xff]
    %v156 = vld [vmem:[#allocation7 + $0x28] sm:$0xff]
    %v157 = vld [vmem:[#allocation7 + $0x30] sm:$0xff]
    %v158 = vld [vmem:[#allocation7 + $0x38] sm:$0xff]
    %v159 = vld [vmem:[#allocation7 + $0x40] sm:$0xff]
    %v160 = vld [vmem:[#allocation7 + $0x48] sm:$0xff]
    %v161 = vld [vmem:[#allocation7 + $0x50] sm:$0xff]
    %v162 = vld [vmem:[#allocation7 + $0x58] sm:$0xff]
    %v163 = vld [vmem:[#allocation7 + $0x60] sm:$0xff]
    %v164 = vld [vmem:[#allocation7 + $0x68] sm:$0xff]
    %v165 = vld [vmem:[#allocation7 + $0x70] sm:$0xff]
    %v166 = vld [vmem:[#allocation7 + $0x78] sm:$0xff]
    %v167 = vld [vmem:[%s4] sm:$0x1]
    %v169 = vlaneseq
    %v170 = vshrl.u32 %v169, 7
    %v171 = vsub.s32 0, %v170
    %v172 = vrot.slane %v167, %v171
    %174 = vmatprep.subr.mxu0 0.0
    %175 = vmatpush1.msra.mxu0 %v151
    %176 = vmatprep.subr.mxu0 0.0
    %177 = vmatpush1.msra.mxu0 %v152
    %178 = vmatprep.subr.mxu0 0.0
    %179 = vmatpush1.msra.mxu0 %v153
    %180 = vmatprep.subr.mxu0 0.0
    %181 = vmatpush1.msra.mxu0 %v154
    %182 = vmatprep.subr.mxu0 0.0
    %183 = vmatpush1.msra.mxu0 %v155
    %184 = vmatprep.subr.mxu0 0.0
    %185 = vmatpush1.msra.mxu0 %v156
    %186 = vmatprep.subr.mxu0 0.0
    %187 = vmatpush1.msra.mxu0 %v157
    %188 = vmatprep.subr.mxu0 0.0
    %189 = vmatpush1.msra.mxu0 %v158
    %190 = vmatprep.subr.mxu0 0.0
    %191 = vmatpush1.msra.mxu0 %v159
    %192 = vmatprep.subr.mxu0 0.0
    %193 = vmatpush1.msra.mxu0 %v160
    %194 = vmatprep.subr.mxu0 0.0
    %195 = vmatpush1.msra.mxu0 %v161
    %196 = vmatprep.subr.mxu0 0.0
    %197 = vmatpush1.msra.mxu0 %v162
    %198 = vmatprep.subr.mxu0 0.0
    %199 = vmatpush1.msra.mxu0 %v163
    %200 = vmatprep.subr.mxu0 0.0
    %201 = vmatpush1.msra.mxu0 %v164
    %202 = vmatprep.subr.mxu0 0.0
    %203 = vmatpush1.msra.mxu0 %v165
    %204 = vmatprep.subr.mxu0 0.0
    %205 = vmatpush1.msra.mxu0 %v166
    %206 = vmatprep.subr.mxu0 0.0
    %207 = vmatpush1.msra.mxu0 0.0
    %208 = vmatprep.subr.mxu0 0.0
    %209 = vmatpush1.msra.mxu0 0.0
    %210 = vmatprep.subr.mxu0 0.0
    %211 = vmatpush1.msra.mxu0 0.0
    %212 = vmatprep.subr.mxu0 0.0
    %213 = vmatpush1.msra.mxu0 0.0
    %214 = vmatprep.subr.mxu0 0.0
    %215 = vmatpush1.msra.mxu0 0.0
    %216 = vmatprep.subr.mxu0 0.0
    %217 = vmatpush1.msra.mxu0 0.0
    %218 = vmatprep.subr.mxu0 0.0
    %219 = vmatpush1.msra.mxu0 0.0
    %220 = vmatprep.subr.mxu0 0.0
    %221 = vmatpush1.msra.mxu0 0.0
    %222 = vmatprep.subr.mxu0 0.0
    %223 = vmatpush1.msra.mxu0 0.0
    %224 = vmatprep.subr.mxu0 0.0
    %225 = vmatpush1.msra.mxu0 0.0
    %226 = vmatprep.subr.mxu0 0.0
    %227 = vmatpush1.msra.mxu0 0.0
    %228 = vmatprep.subr.mxu0 0.0
    %229 = vmatpush1.msra.mxu0 0.0
    %230 = vmatprep.subr.mxu0 0.0
    %231 = vmatpush1.msra.mxu0 0.0
    %232 = vmatprep.subr.mxu0 0.0
    %233 = vmatpush1.msra.mxu0 0.0
    %234 = vmatprep.subr.mxu0 0.0
    %235 = vmatpush1.msra.mxu0 0.0
    %236 = vmatprep.subr.mxu0 0.0
    %237 = vmatpush1.msra.mxu0 0.0
    %238 = vmatprep.mubr.f32.mxu0 0.0
    %239 = vmatmul.mubr.f32.gmra.mrb[0].mxu0 %v150
    %v240 = vpop.f32.mrb[0].mxu0
    %v241 = vadd.f32 %v172, %v240
    %v242 = vpop.f32.mrb[0].mxu0
    %243 = vdwg.mxu0
    %v244 = vmax.f32 %v241, 0.0
    %v245 = vld [vmem:[%s5] sm:$0xff]
    %v246 = vld [vmem:[%s6] sm:$0xff]
    %248 = vset.pattern.permute.xlu0 0
    %249 = vperm.xlu0 %248, %v246
    %v250 = vpop.permute.xlu0 %249
    %252 = vmatprep.subr.mxu0 0.0
    %253 = vmatpush1.xpose.msra.mxu0 %v244
    %254 = vmatprep.subr.mxu0 0.0
    %255 = vmatpush1.xpose.msra.mxu0 0.0
    %256 = vmatprep.subr.mxu0 0.0
    %257 = vmatpush1.xpose.msra.mxu0 0.0
    %258 = vmatprep.subr.mxu0 0.0
    %259 = vmatpush1.xpose.msra.mxu0 0.0
    %260 = vmatprep.subr.mxu0 0.0
    %261 = vmatpush1.xpose.msra.mxu0 0.0
    %262 = vmatprep.subr.mxu0 0.0
    %263 = vmatpush1.xpose.msra.mxu0 0.0
    %264 = vmatprep.subr.mxu0 0.0
    %265 = vmatpush1.xpose.msra.mxu0 0.0
    %266 = vmatprep.subr.mxu0 0.0
    %267 = vmatpush1.xpose.msra.mxu0 0.0
    %268 = vmatprep.subr.mxu0 0.0
    %269 = vmatpush1.xpose.msra.mxu0 0.0
    %270 = vmatprep.subr.mxu0 0.0
    %271 = vmatpush1.xpose.msra.mxu0 0.0
    %272 = vmatprep.subr.mxu0 0.0
    %273 = vmatpush1.xpose.msra.mxu0 0.0
    %274 = vmatprep.subr.mxu0 0.0
    %275 = vmatpush1.xpose.msra.mxu0 0.0
    %276 = vmatprep.subr.mxu0 0.0
    %277 = vmatpush1.xpose.msra.mxu0 0.0
    %278 = vmatprep.subr.mxu0 0.0
    %279 = vmatpush1.xpose.msra.mxu0 0.0
    %280 = vmatprep.subr.mxu0 0.0
    %281 = vmatpush1.xpose.msra.mxu0 0.0
    %282 = vmatprep.subr.mxu0 0.0
    %283 = vmatpush1.xpose.msra.mxu0 0.0
    %284 = vmatprep.subr.mxu0 0.0
    %285 = vmatpush1.xpose.msra.mxu0 0.0
    %286 = vmatprep.subr.mxu0 0.0
    %287 = vmatpush1.xpose.msra.mxu0 0.0
    %288 = vmatprep.subr.mxu0 0.0
    %289 = vmatpush1.xpose.msra.mxu0 0.0
    %290 = vmatprep.subr.mxu0 0.0
    %291 = vmatpush1.xpose.msra.mxu0 0.0
    %292 = vmatprep.subr.mxu0 0.0
    %293 = vmatpush1.xpose.msra.mxu0 0.0
    %294 = vmatprep.subr.mxu0 0.0
    %295 = vmatpush1.xpose.msra.mxu0 0.0
    %296 = vmatprep.subr.mxu0 0.0
    %297 = vmatpush1.xpose.msra.mxu0 0.0
    %298 = vmatprep.subr.mxu0 0.0
    %299 = vmatpush1.xpose.msra.mxu0 0.0
    %300 = vmatprep.subr.mxu0 0.0
    %301 = vmatpush1.xpose.msra.mxu0 0.0
    %302 = vmatprep.subr.mxu0 0.0
    %303 = vmatpush1.xpose.msra.mxu0 0.0
    %304 = vmatprep.subr.mxu0 0.0
    %305 = vmatpush1.xpose.msra.mxu0 0.0
    %306 = vmatprep.subr.mxu0 0.0
    %307 = vmatpush1.xpose.msra.mxu0 0.0
    %308 = vmatprep.subr.mxu0 0.0
    %309 = vmatpush1.xpose.msra.mxu0 0.0
    %310 = vmatprep.subr.mxu0 0.0
    %311 = vmatpush1.xpose.msra.mxu0 0.0
    %312 = vmatprep.subr.mxu0 0.0
    %313 = vmatpush1.xpose.msra.mxu0 0.0
    %314 = vmatprep.subr.mxu0 0.0
    %315 = vmatpush1.xpose.msra.mxu0 0.0
    %316 = vmatprep.mubr.f32.mxu0 0.0
    %317 = vmatmul.mubr.f32.gmra.mrb[0].mxu0 %v245
    %v318 = vpop.f32.mrb[0].mxu0
    %v319 = vadd.f32 %v250, %v318
    %v320 = vpop.f32.mrb[0].mxu0
    %321 = vdwg.mxu0
    %vm322 = vcmask 64512
    %323 = vst.msk [vmem:[#allocation8] sm:$0xff] %vm322, %v319
    // Predicated region
    $region42: #{tpu_custom_call.1} parent=1 // pred_check
      _
    $region43: #{tpu_custom_call.1} parent=1 // pred_check_branch
      %325 = sbr.rel (0) target = $region45
    $region44: #{tpu_custom_call.1} parent=1 // pred_region
      %s327 = ssub.s32 128, 128
      %328 = vsyncadd [#allocation4], %s327
      %s330 = sshll.u32 [#allocation8], 4
      %s331 = int_to_ptr.vmem [resolvable:$true] %s330
      %333 = dma.vmem_to_hbm [thread:$0]  %s331, 128, %s7, [#allocation4]
    $region45: #{tpu_custom_call.1} parent=1 // pred_fallthru
      _
    // Predicated region
    $region46: #{tpu_custom_call.1} parent=1 // pred_check
      _
    $region47: #{tpu_custom_call.1} parent=1 // pred_check_branch
      %335 = sbr.rel (0) target = $region49
    $region48: #{tpu_custom_call.1} parent=1 // pred_region
      %336 = dma.done [#allocation4], 128
    $region49: #{tpu_custom_call.1} parent=1 // pred_fallthru
      _
    %337 = vsyncpa [#allocation3], 1
    %338 = vsyncpa [#allocation6], 1
    %339 = vsyncpa [#allocation4], 1

</llo_original>
